<compile_context>
chip_gen: v7x
topology: tpu7x:2x2x1
jax: 0.10.0
libtpu: 0.0.40
codegen_flags: <defaults>
</compile_context>

<pallas_src>
import functools

import jax
import jax.numpy as jnp
import numpy as np
from jax import lax
from jax.experimental import pallas as pl
from jax.experimental.pallas import tpu as pltpu


def _round_up(x, m):
    return ((x + m - 1) // m) * m


# ---------------------------------------------------------------------------
# Pallas kernels
# ---------------------------------------------------------------------------

def _linear_kernel(x_ref, w_ref, b_ref, out_ref):
    """out = x @ w + b, with w already (D, M) (pre-transposed)."""
    out_ref[...] = (jnp.dot(x_ref[...], w_ref[...],
                            preferred_element_type=jnp.float32) + b_ref[...])


def _gru_rec_kernel(lens_ref, gi_ref, *rest, hidden_size, residual, chunk):
    """GRU recurrence over one time chunk (PyTorch gate order r, z, n).

    lens_ref: (Bp, 1)  int32 sequence lengths
    gi_ref:   (chunk, Bp, 3H)  precomputed x @ W_ih^T + b_ih
    x_ref:    (chunk, Bp, H)   layer input (only when residual=True)
    whh_ref:  (H, 3H)  pre-transposed recurrent weight
    bhh_ref:  (1, 3H)
    out_ref:  (chunk, Bp, H)   masked (+residual) outputs
    h_ref:    (Bp, H)  persistent hidden-state scratch (carried across grid)
    """
    if residual:
        x_ref, whh_ref, bhh_ref, out_ref, h_ref = rest
    else:
        whh_ref, bhh_ref, out_ref, h_ref = rest
        x_ref = None
    H = hidden_size

    @pl.when(pl.program_id(0) == 0)
    def _():
        h_ref[...] = jnp.zeros_like(h_ref)

    whh_t = whh_ref[...]            # (H, 3H)
    bhh = bhh_ref[...]              # (1, 3H)
    lens = lens_ref[...]            # (Bp, 1) int32
    t_base = pl.program_id(0) * chunk

    def step(t, h):
        gi = gi_ref[t]              # (Bp, 3H)
        gh = jnp.dot(h, whh_t, preferred_element_type=jnp.float32) + bhh
        r = jax.nn.sigmoid(gi[:, 0:H] + gh[:, 0:H])
        z = jax.nn.sigmoid(gi[:, H:2 * H] + gh[:, H:2 * H])
        n = jnp.tanh(gi[:, 2 * H:3 * H] + r * gh[:, 2 * H:3 * H])
        h_new = (1.0 - z) * n + z * h
        valid = (t_base + t) < lens                      # (Bp, 1)
        if residual:
            out_t = jnp.where(valid, h_new + x_ref[t], 0.0)
        else:
            out_t = jnp.where(valid, h_new, 0.0)
        out_ref[t] = out_t
        return jnp.where(valid, h_new, h)

    # Unrolled so the LLO scheduler can overlap the recurrent matmul with the
    # sigmoid/tanh EUP work.
    h_ref[...] = lax.fori_loop(0, chunk, step, h_ref[...], unroll=True)


def _vq_kernel(x_ref, wh_ref, bh_ref, wl_ref, bl_ref, wcb_ref, *rest,
               testing, with_hidden):
    """VQ layer: optional MLP -> logits -> (gumbel-)argmax one-hot -> codebook.

    x: (rows, H);  wh: (H, Hq);  bh: (1, Hq);  wl: (Hq|H, C);  bl: (1, C);
    wcb: (C, E).  Outputs: logits (rows, C), codes (rows, E).
    """
    if testing:
        logits_ref, codes_ref = rest
        noise = None
    else:
        noise_ref, logits_ref, codes_ref = rest
        noise = noise_ref[...]

    x = x_ref[...]
    if with_hidden:
        hid = jnp.maximum(
            jnp.dot(x, wh_ref[...], preferred_element_type=jnp.float32)
            + bh_ref[...], 0.0)
        logits = jnp.dot(hid, wl_ref[...],
                         preferred_element_type=jnp.float32) + bl_ref[...]
    else:
        logits = jnp.dot(x, wl_ref[...],
                         preferred_element_type=jnp.float32) + bl_ref[...]
    logits_ref[...] = logits

    # Forward value of the straight-through gumbel-softmax is the hard one-hot
    # of argmax(logits + g); temperature/softmax do not change the argmax.
    y = logits if testing else logits + noise
    C = y.shape[-1]
    mx = jnp.max(y, axis=-1, keepdims=True)
    iota = lax.broadcasted_iota(jnp.int32, y.shape, 1)
    ind = jnp.min(jnp.where(y == mx, iota, C), axis=-1, keepdims=True)
    onehot = (iota == ind).astype(jnp.float32)
    codes_ref[...] = jnp.dot(onehot, wcb_ref[...],
                             preferred_element_type=jnp.float32)


# ---------------------------------------------------------------------------
# Wrappers around pallas_call
# ---------------------------------------------------------------------------

def linear_tiled(x_ND, w_t_DM, b_1M, *, block_rows=512):
    """Row-tiled y = x @ w + b.  (Halve block_rows for v7x's 64 MiB VMEM.)"""
    N, D = x_ND.shape
    M = w_t_DM.shape[1]
    rows = min(block_rows, _round_up(N, 8))
    Np = _round_up(N, rows)
    if Np != N:
        x_ND = jnp.pad(x_ND, ((0, Np - N), (0, 0)))
    out = pl.pallas_call(
        _linear_kernel,
        out_shape=jax.ShapeDtypeStruct((Np, M), jnp.float32),
        grid=(Np // rows,),
        in_specs=[pl.BlockSpec((rows, D), lambda i: (i, 0)),
                  pl.BlockSpec((D, M), lambda i: (0, 0)),
                  pl.BlockSpec((1, M), lambda i: (0, 0))],
        out_specs=pl.BlockSpec((rows, M), lambda i: (i, 0)),
        compiler_params=pltpu.CompilerParams(
            dimension_semantics=("parallel",)),
    )(x_ND, w_t_DM, b_1M)
    return out[:N] if Np != N else out


def gru_layer(gi_LBG, x_LBI, lens_B1, rnn_p, hidden_size, residual, chunk):
    """Time-chunked GRU recurrence with hidden state in persistent scratch."""
    Lp, Bp, G = gi_LBG.shape
    nchunks = Lp // chunk
    kernel = functools.partial(_gru_rec_kernel, hidden_size=hidden_size,
                               residual=residual, chunk=chunk)
    in_specs = [pl.BlockSpec((Bp, 1), lambda c: (0, 0)),
                pl.BlockSpec((chunk, Bp, G), lambda c: (c, 0, 0))]
    args = [lens_B1, gi_LBG]
    if residual:
        I = x_LBI.shape[-1]
        in_specs.append(pl.BlockSpec((chunk, Bp, I), lambda c: (c, 0, 0)))
        args.append(x_LBI)
    in_specs += [pl.BlockSpec((hidden_size, G), lambda c: (0, 0)),
                 pl.BlockSpec((1, G), lambda c: (0, 0))]
    args += [rnn_p["w_hh_t"], rnn_p["b_hh"]]
    return pl.pallas_call(
        kernel,
        out_shape=jax.ShapeDtypeStruct((Lp, Bp, hidden_size), jnp.float32),
        grid=(nchunks,),
        in_specs=in_specs,
        out_specs=pl.BlockSpec((chunk, Bp, hidden_size),
                               lambda c: (c, 0, 0)),
        scratch_shapes=[pltpu.VMEM((Bp, hidden_size), jnp.float32)],
        compiler_params=pltpu.CompilerParams(
            dimension_semantics=("arbitrary",)),   # sequential recurrence
    )(*args)


def vq_layer(x_NH, vq_p, noise_NC, testing, *, block_rows=512):
    """Row-tiled VQ layer.  noise_NC is precomputed Gumbel noise (training)."""
    N, H = x_NH.shape
    C = vq_p["w_logits_t"].shape[1]
    E = vq_p["w_codebook_t"].shape[1]
    rows = min(block_rows, _round_up(N, 8))
    Np = _round_up(N, rows)
    pad = Np - N
    if pad:
        x_NH = jnp.pad(x_NH, ((0, pad), (0, 0)))
        if noise_NC is not None:
            noise_NC = jnp.pad(noise_NC, ((0, pad), (0, 0)))

    kernel = functools.partial(_vq_kernel, testing=testing,
                               with_hidden=vq_p["with_hidden"])
    in_specs = [pl.BlockSpec((rows, H), lambda i: (i, 0)),
                pl.BlockSpec(vq_p["w_hid_t"].shape, lambda i: (0, 0)),
                pl.BlockSpec(vq_p["b_hid"].shape, lambda i: (0, 0)),
                pl.BlockSpec(vq_p["w_logits_t"].shape, lambda i: (0, 0)),
                pl.BlockSpec(vq_p["b_logits"].shape, lambda i: (0, 0)),
                pl.BlockSpec(vq_p["w_codebook_t"].shape, lambda i: (0, 0))]
    args = [x_NH, vq_p["w_hid_t"], vq_p["b_hid"], vq_p["w_logits_t"],
            vq_p["b_logits"], vq_p["w_codebook_t"]]
    if not testing:
        in_specs.append(pl.BlockSpec((rows, C), lambda i: (i, 0)))
        args.append(noise_NC)

    logits, codes = pl.pallas_call(
        kernel,
        out_shape=(jax.ShapeDtypeStruct((Np, C), jnp.float32),
                   jax.ShapeDtypeStruct((Np, E), jnp.float32)),
        grid=(Np // rows,),
        in_specs=in_specs,
        out_specs=(pl.BlockSpec((rows, C), lambda i: (i, 0)),
                   pl.BlockSpec((rows, E), lambda i: (i, 0))),
        compiler_params=pltpu.CompilerParams(
            dimension_semantics=("parallel",)),
    )(*args)
    if pad:
        logits, codes = logits[:N], codes[:N]
    return logits, codes


# ---------------------------------------------------------------------------
# Model: parameter init + forward
# ---------------------------------------------------------------------------

def init_params(key, *, input_size, hidden_size, num_layers, codebook_size,
                code_dim, vq_hidden_size, apply_vq):
    assert hidden_size == code_dim
    keys = iter(jax.random.split(key, 8 * num_layers + 4))

    def rand(shape, scale=0.1):
        return scale * jax.random.normal(next(keys), shape, dtype=jnp.float32)

    params = {"rnn": [], "vq": [], "postnet": None}
    in_sizes = [input_size] + [hidden_size] * (num_layers - 1)
    for i in range(num_layers):
        I, H = in_sizes[i], hidden_size
        # Pre-transposed weights: (I, 3H) and (H, 3H).
        params["rnn"].append({
            "w_ih_t": rand((I, 3 * H)),
            "w_hh_t": rand((H, 3 * H)),
            "b_ih": rand((1, 3 * H)),
            "b_hh": rand((1, 3 * H)),
        })
        if apply_vq[i]:
            with_hidden = vq_hidden_size > 0
            if with_hidden:
                w_hid_t = rand((hidden_size, vq_hidden_size))
                b_hid = rand((1, vq_hidden_size))
                logits_in = vq_hidden_size
            else:
                w_hid_t = jnp.zeros((hidden_size, 8), jnp.float32)  # dummy
                b_hid = jnp.zeros((1, 8), jnp.float32)              # dummy
                logits_in = hidden_size
            params["vq"].append({
                "with_hidden": with_hidden,
                "w_hid_t": w_hid_t,
                "b_hid": b_hid,
                "w_logits_t": rand((logits_in, codebook_size)),
                "b_logits": rand((1, codebook_size)),
                "w_codebook_t": rand((codebook_size, code_dim)),
            })
        else:
            params["vq"].append(None)
    params["postnet"] = {"w_t": rand((code_dim, input_size)),
                         "b": rand((1, input_size))}
    return params


def gumbel_apc_forward(params, frames_BxLxM, seq_lengths_B, *, testing,
                       residual=True, rng_key=None, time_chunk=16):
    """Returns (predicted_BxLxM, hiddens_NxBxLxH, list of logits_BxLxC/None)."""
    B, L, M = frames_BxLxM.shape
    H = params["rnn"][0]["w_hh_t"].shape[0]
    Bp = _round_up(B, 8)                    # fill f32 sublanes
    chunk = min(time_chunk, L)
    Lp = _round_up(L, chunk)

    # Time-major padded layout (Lp, Bp, D); padded rows have length 0.
    x = jnp.transpose(frames_BxLxM.astype(jnp.float32), (1, 0, 2))
    x = jnp.pad(x, ((0, Lp - L), (0, Bp - B), (0, 0)))
    lens = jnp.pad(seq_lengths_B.astype(jnp.int32), (0, Bp - B)).reshape(Bp, 1)

    if rng_key is None:
        rng_key = jax.random.PRNGKey(0)

    hiddens_tm = []
    logits_list = []
    layer_in = x                            # (Lp, Bp, D_in), time-major
    for i, (rnn_p, vq_p) in enumerate(zip(params["rnn"], params["vq"])):
        D_in = layer_in.shape[-1]
        # Hoisted input projection: one large, well-shaped MXU matmul.
        gi = linear_tiled(layer_in.reshape(Lp * Bp, D_in),
                          rnn_p["w_ih_t"], rnn_p["b_ih"])
        gi = gi.reshape(Lp, Bp, 3 * H)
        res = residual and i > 0
        out_tm = gru_layer(gi, layer_in, lens, rnn_p, H, res, chunk)
        # TODO(synk): nn.Dropout treated as identity (eval mode).
        hiddens_tm.append(out_tm)           # post-residual, pre-VQ

        if vq_p is not None:
            N = Lp * Bp
            C = vq_p["w_logits_t"].shape[1]
            if testing:
                noise = None
            else:
                rng_key, sub = jax.random.split(rng_key)
                noise = jax.random.gumbel(sub, (N, C), dtype=jnp.float32)
            logits_NC, codes_NE = vq_layer(out_tm.reshape(N, H), vq_p,
                                           noise, testing)
            logits_list.append(logits_NC.reshape(Lp, Bp, C))
            layer_in = codes_NE.reshape(Lp, Bp, -1)
        else:
            logits_list.append(None)
            layer_in = out_tm

    # Postnet on the last layer output (codes if VQ'd, else GRU output).
    E = layer_in.shape[-1]
    pred = linear_tiled(layer_in.reshape(Lp * Bp, E),
                        params["postnet"]["w_t"], params["postnet"]["b"])
    pred = pred.reshape(Lp, Bp, M)

    # Un-pad + single transpose back to batch-first at the very end.
    predicted_BxLxM = jnp.transpose(pred[:L, :B], (1, 0, 2))
    hiddens_NxBxLxH = jnp.transpose(jnp.stack(hiddens_tm)[:, :L, :B],
                                    (0, 2, 1, 3))
    logits_out = [None if lg is None
                  else jnp.transpose(lg[:L, :B], (1, 0, 2))
                  for lg in logits_list]
    return predicted_BxLxM, hiddens_NxBxLxH, logits_out


# ---------------------------------------------------------------------------
# Pure-JAX reference for the first layer (continuous quantities only)
# ---------------------------------------------------------------------------

def _reference_layer0(params, frames, lens):
    B, L, _ = frames.shape
    rnn_p, vq_p = params["rnn"][0], params["vq"][0]
    H = rnn_p["w_hh_t"].shape[0]
    h = jnp.zeros((B, H), jnp.float32)
    outs = []
    for t in range(L):
        xt = frames[:, t].astype(jnp.float32)
        gi = xt @ rnn_p["w_ih_t"] + rnn_p["b_ih"]
        gh = h @ rnn_p["w_hh_t"] + rnn_p["b_hh"]
        r = jax.nn.sigmoid(gi[:, :H] + gh[:, :H])
        z = jax.nn.sigmoid(gi[:, H:2 * H] + gh[:, H:2 * H])
        n = jnp.tanh(gi[:, 2 * H:] + r * gh[:, 2 * H:])
        h_new = (1.0 - z) * n + z * h
        valid = (t < lens)[:, None]
        outs.append(jnp.where(valid, h_new, 0.0))
        h = jnp.where(valid, h_new, h)
    out = jnp.stack(outs, axis=1)                          # (B, L, H)
    if vq_p is None:
        return out, None
    if vq_p["with_hidden"]:
        hid = jnp.maximum(out @ vq_p["w_hid_t"] + vq_p["b_hid"], 0.0)
        logits = hid @ vq_p["w_logits_t"] + vq_p["b_logits"]
    else:
        logits = out @ vq_p["w_logits_t"] + vq_p["b_logits"]
    return out, logits


# ---------------------------------------------------------------------------
# Main
# ---------------------------------------------------------------------------

if __name__ == "__main__":
    B, L = 2, 8
    input_size = 16          # "Mel" feature dim
    hidden_size = 32         # RNN hidden size == code_dim
    num_layers = 2
    codebook_size = 16
    code_dim = 32
    vq_hidden_size = 16
    apply_vq = [True, True]
    residual = True

    key = jax.random.PRNGKey(0)
    k_param, k_frames, k_noise = jax.random.split(key, 3)
    params = init_params(k_param,
                         input_size=input_size, hidden_size=hidden_size,
                         num_layers=num_layers, codebook_size=codebook_size,
                         code_dim=code_dim, vq_hidden_size=vq_hidden_size,
                         apply_vq=apply_vq)

    frames_BxLxM = jax.random.normal(k_frames, (B, L, input_size), jnp.float32)
    seq_lengths_B = jnp.array([8, 5], dtype=jnp.int32)

    # testing / inference path (deterministic argmax one-hot)
    predicted, hiddens, logits = gumbel_apc_forward(
        params, frames_BxLxM, seq_lengths_B, testing=True, residual=residual)
    jax.block_until_ready(predicted)
    jax.block_until_ready(hiddens)
    for lg in logits:
        if lg is not None:
            jax.block_until_ready(lg)

    # training path (Gumbel noise generated outside the kernel, same distrib.)
    predicted_tr, hiddens_tr, logits_tr = gumbel_apc_forward(
        params, frames_BxLxM, seq_lengths_B, testing=False,
        residual=residual, rng_key=k_noise)
    jax.block_until_ready(predicted_tr)

    # shape checks
    assert predicted.shape == (B, L, input_size)
    assert hiddens.shape == (num_layers, B, L, hidden_size)
    assert all(lg is None or lg.shape == (B, L, codebook_size) for lg in logits)

    # numerical sanity check on layer-0 hidden + logits (no argmax branches)
    ref_h0, ref_lg0 = _reference_layer0(params, frames_BxLxM, seq_lengths_B)
    assert float(jnp.max(jnp.abs(hiddens[0] - ref_h0))) < 5e-2
    if ref_lg0 is not None and logits[0] is not None:
        assert float(jnp.max(jnp.abs(logits[0] - ref_lg0))) < 5e-2

    print("KERNEL_OK")
</pallas_src>

<mosaic_0001>
module attributes {stable_mosaic.version = 11 : i64} {
  func.func @_linear_kernel(%arg0: i32, %arg1: memref<64x16xf32, #tpu.memory_space<vmem>>, %arg2: memref<16x96xf32, #tpu.memory_space<vmem>>, %arg3: memref<1x96xf32, #tpu.memory_space<vmem>>, %arg4: memref<64x96xf32, #tpu.memory_space<vmem>>) attributes {dimension_semantics = [#tpu.dimension_semantics<parallel>], iteration_bounds = array<i64: 1>, scalar_prefetch = 0 : i64, scratch_operands = 0 : i64, tpu.core_type = #tpu.core_type<tc>, window_params = [{transform_indices = @transform_0, window_bounds = array<i64: 64, 16>}, {pipeline_mode = #tpu.pipeline_mode<synchronous>, transform_indices = @transform_1, window_bounds = array<i64: 16, 96>}, {pipeline_mode = #tpu.pipeline_mode<synchronous>, transform_indices = @transform_2, window_bounds = array<i64: 1, 96>}, {transform_indices = @transform_3, window_bounds = array<i64: 64, 96>}]} {
    %c0 = arith.constant 0 : index
    %c0_0 = arith.constant 0 : index
    %0 = vector.load %arg1[%c0, %c0_0] : memref<64x16xf32, #tpu.memory_space<vmem>>, vector<64x16xf32>
    %c0_1 = arith.constant 0 : index
    %c0_2 = arith.constant 0 : index
    %1 = vector.load %arg2[%c0_1, %c0_2] : memref<16x96xf32, #tpu.memory_space<vmem>>, vector<16x96xf32>
    %cst = arith.constant dense<0.000000e+00> : vector<64x96xf32>
    %2 = tpu.matmul %0, %1, %cst {dimension_numbers = #tpu.dot_dimension_numbers<[1], [0], [0], [1], [0, 0, 1, 1], [], []>} : vector<64x16xf32>, vector<16x96xf32>, vector<64x96xf32> -> vector<64x96xf32>
    %c0_3 = arith.constant 0 : index
    %c0_4 = arith.constant 0 : index
    %3 = vector.load %arg3[%c0_3, %c0_4] : memref<1x96xf32, #tpu.memory_space<vmem>>, vector<1x96xf32>
    %4 = vector.broadcast %3 : vector<1x96xf32> to vector<64x96xf32>
    %5 = arith.addf %2, %4 : vector<64x96xf32>
    %c0_5 = arith.constant 0 : index
    %c0_6 = arith.constant 0 : index
    %6 = vector.load %arg4[%c0_5, %c0_6] : memref<64x96xf32, #tpu.memory_space<vmem>>, vector<64x96xf32>
    tpu.vector_store %arg4[%c0_5, %c0_6], %5 {strides = array<i32>} : memref<64x96xf32, #tpu.memory_space<vmem>>, vector<64x96xf32>,
    return
  }
  func.func @transform_0(%arg0: i32) -> (i32, i32) {
    %c0_i32 = arith.constant 0 : i32
    %c0_i32_0 = arith.constant 0 : i32
    return %arg0, %c0_i32 : i32, i32
  }
  func.func @transform_1(%arg0: i32) -> (i32, i32) {
    %c0_i32 = arith.constant 0 : i32
    %c0_i32_0 = arith.constant 0 : i32
    %c0_i32_1 = arith.constant 0 : i32
    return %c0_i32, %c0_i32_0 : i32, i32
  }
  func.func @transform_2(%arg0: i32) -> (i32, i32) {
    %c0_i32 = arith.constant 0 : i32
    %c0_i32_0 = arith.constant 0 : i32
    %c0_i32_1 = arith.constant 0 : i32
    return %c0_i32, %c0_i32_0 : i32, i32
  }
  func.func @transform_3(%arg0: i32) -> (i32, i32) {
    %c0_i32 = arith.constant 0 : i32
    %c0_i32_0 = arith.constant 0 : i32
    return %arg0, %c0_i32 : i32, i32
  }
}

</mosaic_0001>

<llo_original>
// kernel: tpu_custom_call.1
$region0: #{tpu_custom_call.1}
  #allocation0 [shape = 'u32[]', space=smem, size = 0x4, offset = 0x4, fixed_abs, tag = 'smem constant byte address 0x4 - core index']
  #allocation1 [shape = 'u32[144,128]{1,0:T(1,128)}', space=vmem, size = 0x12000, scoped, tag = 'internal scratch']
  %s0 = inlined_call_operand.vmem [shape: f32[64,16], index: 0, kind: input, shape index: {}]
  %s1 = inlined_call_operand.vmem [shape: f32[16,96], index: 1, kind: input, shape index: {}]
  %s2 = inlined_call_operand.vmem [shape: f32[1,96], index: 2, kind: input, shape index: {}]
  %s3 = inlined_call_operand.hbm [shape: f32[64,96], index: 3, kind: output, shape index: {}]
  %s4 = sld [smem:[#allocation0]]
  $region22: #{tpu_custom_call.1} parent=0
    _
  %s6 = ssub.s32 1, %s4
  %s7 = scalar_select 0, %s6, %s4
  $region1: #{tpu_custom_call.1} parent=0
    #allocation2 [shape = 'u8[32768]{0}', space=vmem, size = 0x8000, scoped, tag = 'output window, operand 0, single buffered']
    #allocation3 [shape = 's32[1]{0}', space=sflag, size = 0x4, scoped, tag = 'scoped memory for tpu_custom_call.1']
    %8 = vsyncpa [#allocation3], 0
    // Predicated region
    $region2: #{tpu_custom_call.1} parent=1 // pred_check
      _
    $region3: #{tpu_custom_call.1} parent=1 // pred_check_branch
      %10 = sbr.rel (0) target = $region5
    $region4: #{tpu_custom_call.1} parent=1 // pred_region
      _
    $region5: #{tpu_custom_call.1} parent=1 // pred_fallthru
      _
    // Predicated region
    $region6: #{tpu_custom_call.1} parent=1 // pred_check
      _
    $region7: #{tpu_custom_call.1} parent=1 // pred_check_branch
      %12 = sbr.rel (0) target = $region9
    $region8: #{tpu_custom_call.1} parent=1 // pred_region
      _
    $region9: #{tpu_custom_call.1} parent=1 // pred_fallthru
      _
    // Predicated region
    $region10: #{tpu_custom_call.1} parent=1 // pred_check
      _
    $region11: #{tpu_custom_call.1} parent=1 // pred_check_branch
      %14 = sbr.rel (0) target = $region13
    $region12: #{tpu_custom_call.1} parent=1 // pred_region
      _
    $region13: #{tpu_custom_call.1} parent=1 // pred_fallthru
      _
    %v15 = vld [vmem:[%s0] sm:$0xff]
    %v16 = vld [vmem:[%s0 + $0x8] sm:$0xff]
    %v17 = vld [vmem:[%s0 + $0x10] sm:$0xff]
    %v18 = vld [vmem:[%s0 + $0x18] sm:$0xff]
    %v19 = vld [vmem:[%s0 + $0x20] sm:$0xff]
    %v20 = vld [vmem:[%s0 + $0x28] sm:$0xff]
    %v21 = vld [vmem:[%s0 + $0x30] sm:$0xff]
    %v22 = vld [vmem:[%s0 + $0x38] sm:$0xff]
    %v23 = vld [vmem:[%s1] sm:$0xff]
    %v24 = vld [vmem:[%s1 + $0x8] sm:$0xff]
    %v25 = vld [vmem:[%s2] sm:$0x1]
    %v27 = vlaneseq
    %v28 = vshrl.u32 %v27, 7
    %v29 = vsub.s32 0, %v28
    %v30 = vrot.slane %v25, %v29
    %vm32 = vcmask 130048
    %v34 = vsel %vm32, %v15, 0
    %v37 = vsel %vm32, %v16, 0
    %v40 = vsel %vm32, %v17, 0
    %v43 = vsel %vm32, %v18, 0
    %v46 = vsel %vm32, %v19, 0
    %v49 = vsel %vm32, %v20, 0
    %v52 = vsel %vm32, %v21, 0
    %v55 = vsel %vm32, %v22, 0
    %57 = vmatprep.subr.mxu0 0.0
    %58 = vmatpush1.msra.mxu0 %v23
    %59 = vmatprep.subr.mxu0 0.0
    %60 = vmatpush1.msra.mxu0 %v24
    %61 = vmatprep.subr.mxu0 0.0
    %62 = vmatpush1.msra.mxu0 0.0
    %63 = vmatprep.subr.mxu0 0.0
    %64 = vmatpush1.msra.mxu0 0.0
    %65 = vmatprep.subr.mxu0 0.0
    %66 = vmatpush1.msra.mxu0 0.0
    %67 = vmatprep.subr.mxu0 0.0
    %68 = vmatpush1.msra.mxu0 0.0
    %69 = vmatprep.subr.mxu0 0.0
    %70 = vmatpush1.msra.mxu0 0.0
    %71 = vmatprep.subr.mxu0 0.0
    %72 = vmatpush1.msra.mxu0 0.0
    %73 = vmatprep.subr.mxu0 0.0
    %74 = vmatpush1.msra.mxu0 0.0
    %75 = vmatprep.subr.mxu0 0.0
    %76 = vmatpush1.msra.mxu0 0.0
    %77 = vmatprep.subr.mxu0 0.0
    %78 = vmatpush1.msra.mxu0 0.0
    %79 = vmatprep.subr.mxu0 0.0
    %80 = vmatpush1.msra.mxu0 0.0
    %81 = vmatprep.subr.mxu0 0.0
    %82 = vmatpush1.msra.mxu0 0.0
    %83 = vmatprep.subr.mxu0 0.0
    %84 = vmatpush1.msra.mxu0 0.0
    %85 = vmatprep.subr.mxu0 0.0
    %86 = vmatpush1.msra.mxu0 0.0
    %87 = vmatprep.subr.mxu0 0.0
    %88 = vmatpush1.msra.mxu0 0.0
    %89 = vmatprep.subr.mxu0 0.0
    %90 = vmatpush1.msra.mxu0 0.0
    %91 = vmatprep.subr.mxu0 0.0
    %92 = vmatpush1.msra.mxu0 0.0
    %93 = vmatprep.subr.mxu0 0.0
    %94 = vmatpush1.msra.mxu0 0.0
    %95 = vmatprep.subr.mxu0 0.0
    %96 = vmatpush1.msra.mxu0 0.0
    %97 = vmatprep.subr.mxu0 0.0
    %98 = vmatpush1.msra.mxu0 0.0
    %99 = vmatprep.subr.mxu0 0.0
    %100 = vmatpush1.msra.mxu0 0.0
    %101 = vmatprep.subr.mxu0 0.0
    %102 = vmatpush1.msra.mxu0 0.0
    %103 = vmatprep.subr.mxu0 0.0
    %104 = vmatpush1.msra.mxu0 0.0
    %105 = vmatprep.subr.mxu0 0.0
    %106 = vmatpush1.msra.mxu0 0.0
    %107 = vmatprep.subr.mxu0 0.0
    %108 = vmatpush1.msra.mxu0 0.0
    %109 = vmatprep.subr.mxu0 0.0
    %110 = vmatpush1.msra.mxu0 0.0
    %111 = vmatprep.subr.mxu0 0.0
    %112 = vmatpush1.msra.mxu0 0.0
    %113 = vmatprep.subr.mxu0 0.0
    %114 = vmatpush1.msra.mxu0 0.0
    %115 = vmatprep.subr.mxu0 0.0
    %116 = vmatpush1.msra.mxu0 0.0
    %117 = vmatprep.subr.mxu0 0.0
    %118 = vmatpush1.msra.mxu0 0.0
    %119 = vmatprep.subr.mxu0 0.0
    %120 = vmatpush1.msra.mxu0 0.0
    %121 = vmatprep.mubr.f32.mxu0 0.0
    %122 = vmatmul.mubr.f32.gmra.mrb[0].mxu0 %v34
    %v123 = vpop.f32.mrb[0].mxu0
    %v124 = vadd.f32 %v30, %v123
    %v125 = vpop.f32.mrb[0].mxu0
    %126 = vmatprep.mubr.f32.mxu0 0.0
    %127 = vmatmul.mubr.f32.gmra.mrb[0].mxu0 %v37
    %v128 = vpop.f32.mrb[0].mxu0
    %v129 = vadd.f32 %v30, %v128
    %v130 = vpop.f32.mrb[0].mxu0
    %131 = vmatprep.mubr.f32.mxu0 0.0
    %132 = vmatmul.mubr.f32.gmra.mrb[0].mxu0 %v40
    %v133 = vpop.f32.mrb[0].mxu0
    %v134 = vadd.f32 %v30, %v133
    %v135 = vpop.f32.mrb[0].mxu0
    %136 = vmatprep.mubr.f32.mxu0 0.0
    %137 = vmatmul.mubr.f32.gmra.mrb[0].mxu0 %v43
    %v138 = vpop.f32.mrb[0].mxu0
    %v139 = vadd.f32 %v30, %v138
    %v140 = vpop.f32.mrb[0].mxu0
    %141 = vmatprep.mubr.f32.mxu0 0.0
    %142 = vmatmul.mubr.f32.gmra.mrb[0].mxu0 %v46
    %v143 = vpop.f32.mrb[0].mxu0
    %v144 = vadd.f32 %v30, %v143
    %v145 = vpop.f32.mrb[0].mxu0
    %146 = vmatprep.mubr.f32.mxu0 0.0
    %147 = vmatmul.mubr.f32.gmra.mrb[0].mxu0 %v49
    %v148 = vpop.f32.mrb[0].mxu0
    %v149 = vadd.f32 %v30, %v148
    %v150 = vpop.f32.mrb[0].mxu0
    %151 = vmatprep.mubr.f32.mxu0 0.0
    %152 = vmatmul.mubr.f32.gmra.mrb[0].mxu0 %v52
    %v153 = vpop.f32.mrb[0].mxu0
    %v154 = vadd.f32 %v30, %v153
    %v155 = vpop.f32.mrb[0].mxu0
    %156 = vmatprep.mubr.f32.mxu0 0.0
    %157 = vmatmul.mubr.f32.gmra.mrb[0].mxu0 %v55
    %v158 = vpop.f32.mrb[0].mxu0
    %v159 = vadd.f32 %v30, %v158
    %v160 = vpop.f32.mrb[0].mxu0
    %161 = vdwg.mxu0
    %vm162 = vcmask 785408
    %163 = vst.msk [vmem:[#allocation2] sm:$0xff] %vm162, %v124
    %164 = vst.msk [vmem:[#allocation2 + $0x8] sm:$0xff] %vm162, %v129
    %165 = vst.msk [vmem:[#allocation2 + $0x10] sm:$0xff] %vm162, %v134
    %166 = vst.msk [vmem:[#allocation2 + $0x18] sm:$0xff] %vm162, %v139
    %167 = vst.msk [vmem:[#allocation2 + $0x20] sm:$0xff] %vm162, %v144
    %168 = vst.msk [vmem:[#allocation2 + $0x28] sm:$0xff] %vm162, %v149
    %169 = vst.msk [vmem:[#allocation2 + $0x30] sm:$0xff] %vm162, %v154
    %170 = vst.msk [vmem:[#allocation2 + $0x38] sm:$0xff] %vm162, %v159
    // Predicated region
    $region14: #{tpu_custom_call.1} parent=1 // pred_check
      _
    $region15: #{tpu_custom_call.1} parent=1 // pred_check_branch
      %172 = sbr.rel (0) target = $region17
    $region16: #{tpu_custom_call.1} parent=1 // pred_region
      %s174 = ssub.s32 1024, 1024
      %175 = vsyncadd [#allocation3], %s174
      %s176 = sshll.u32 [#allocation2], 4
      %s177 = int_to_ptr.vmem [resolvable:$true] %s176
      %182 = dma.vmem_to_hbm [thread:$0]  %s177, 1024, %s3, [#allocation3], 128, 128, 8
    $region17: #{tpu_custom_call.1} parent=1 // pred_fallthru
      _
    // Predicated region
    $region18: #{tpu_custom_call.1} parent=1 // pred_check
      _
    $region19: #{tpu_custom_call.1} parent=1 // pred_check_branch
      %184 = sbr.rel (0) target = $region21
    $region20: #{tpu_custom_call.1} parent=1 // pred_region
      %185 = dma.done [#allocation3], 1024
    $region21: #{tpu_custom_call.1} parent=1 // pred_fallthru
      _
    %186 = vsyncpa [#allocation3], 1

</llo_original>
